<compile_context>
chip_gen: v5e
topology: v5e:2x2
jax: 0.10.0
libtpu: 0.0.40
codegen_flags: <defaults>
</compile_context>

<pallas_src>
import functools

import jax
import jax.numpy as jnp
from jax.experimental import pallas as pl
from jax.experimental.pallas import tpu as pltpu


def _round_up(x, m):
    return ((x + m - 1) // m) * m


def _clip_head_kernel(img_ref, txt_ref, w_img_ref, w_txt_ref, b_ref, out_ref):
    # Features stream in as bf16. Upcast only for the sum-of-squares (f32 keeps
    # the reduction accurate; v5e's VPU has no bf16 path anyway).
    img = img_ref[...]
    txt = txt_ref[...]
    img_f32 = img.astype(jnp.float32)
    txt_f32 = txt.astype(jnp.float32)

    # x / ||x||  ==  x * rsqrt(sum(x^2, -1));  rsqrt runs on the EUP.
    inv_img = jax.lax.rsqrt(jnp.sum(img_f32 * img_f32, axis=-1, keepdims=True))
    inv_txt = jax.lax.rsqrt(jnp.sum(txt_f32 * txt_f32, axis=-1, keepdims=True))

    # (x * s) @ W == (x @ W) * s for a per-row scalar s: feed the raw bf16
    # features to the MXU and apply the normalization to the (TB, C_pad)
    # results (fewer VALU multiplies, no pre-MXU requantization).
    logit_img = jnp.dot(img, w_img_ref[...], preferred_element_type=jnp.float32)
    logit_txt = jnp.dot(txt, w_txt_ref[...], preferred_element_type=jnp.float32)

    logits = logit_img * inv_img + logit_txt * inv_txt + b_ref[...]
    out_ref[...] = logits.astype(out_ref.dtype)


def clip_bias_classifier_head(image_features, text_features, weight, bias, *,
                              block_b=512):
    """Pallas head for CLIPBiasClassifier.

    image_features: (B, Dv)      output of clip.get_image_features
    text_features:  (B, Dt)      output of clip.get_text_features
    weight:         (C, Dv+Dt)   nn.Linear.weight layout
    bias:           (C,)         nn.Linear.bias
    Returns logits of shape (B, C), float32.
    """
    B, Dv = image_features.shape
    Bt, Dt = text_features.shape
    assert Bt == B
    C, Dc = weight.shape
    assert Dc == Dv + Dt

    # ---- host-side glue: layout + padding (XLA ops, outside the kernel) ----
    # Lane-dense output / full MXU N dimension: pad classes to >=128.
    C_pad = max(128, _round_up(C, 128))
    w_t = weight.T.astype(jnp.bfloat16)                      # (Dv+Dt, C)
    w_img = jnp.zeros((Dv, C_pad), jnp.bfloat16).at[:, :C].set(w_t[:Dv, :])
    w_txt = jnp.zeros((Dt, C_pad), jnp.bfloat16).at[:, :C].set(w_t[Dv:, :])
    b = jnp.zeros((1, C_pad), jnp.float32).at[:, :C].set(
        bias.astype(jnp.float32).reshape(1, C))

    # Memory-bound on the features: stream them as bf16 (halves HBM bytes).
    img = image_features.astype(jnp.bfloat16)
    txt = text_features.astype(jnp.bfloat16)

    # Batch tile. If B fits in one tile, use the full dim (always legal).
    # Otherwise use a multiple-of-8 tile and pad the batch with a safe
    # constant (padded rows are discarded by the final slice; 1.0 keeps the
    # rsqrt finite so no NaN can propagate).
    TB = B if B <= block_b else block_b
    B_pad = _round_up(B, TB)
    if B_pad != B:
        pad = ((0, B_pad - B), (0, 0))
        img = jnp.pad(img, pad, constant_values=1.0)
        txt = jnp.pad(txt, pad, constant_values=1.0)

    grid = (B_pad // TB,)

    out = pl.pallas_call(
        _clip_head_kernel,
        out_shape=jax.ShapeDtypeStruct((B_pad, C_pad), jnp.float32),
        grid=grid,
        in_specs=[
            pl.BlockSpec((TB, Dv), lambda i: (i, 0)),       # streamed per tile
            pl.BlockSpec((TB, Dt), lambda i: (i, 0)),       # streamed per tile
            pl.BlockSpec((Dv, C_pad), lambda i: (0, 0)),    # resident weight (img half)
            pl.BlockSpec((Dt, C_pad), lambda i: (0, 0)),    # resident weight (txt half)
            pl.BlockSpec((1, C_pad), lambda i: (0, 0)),     # resident bias
        ],
        out_specs=pl.BlockSpec((TB, C_pad), lambda i: (i, 0)),
        compiler_params=pltpu.CompilerParams(
            # Rows are independent -> megacore sharding on v7x.
            dimension_semantics=("parallel",),
        ),
    )(img, txt, w_img, w_txt, b)

    return out[:B, :C]


if __name__ == "__main__":
    # Small synthetic shapes consistent with the module's head:
    #   batch=2, vision feature dim=32, text feature dim=32, num_classes=2.
    B, Dv, Dt, C = 2, 32, 32, 2

    key = jax.random.PRNGKey(0)
    k1, k2, k3, k4 = jax.random.split(key, 4)

    # TODO(synk): the pretrained CLIP vision/text transformer backbones
    # (clip.get_image_features / clip.get_text_features) are not re-implemented;
    # their pooled feature outputs are synthesized deterministically here.
    image_features = jax.random.normal(k1, (B, Dv), dtype=jnp.float32)
    text_features = jax.random.normal(k2, (B, Dt), dtype=jnp.float32)

    # nn.Linear(fusion_dim, num_classes) params in PyTorch layout.
    weight = jax.random.normal(k3, (C, Dv + Dt), dtype=jnp.float32) * 0.02
    bias = jax.random.normal(k4, (C,), dtype=jnp.float32) * 0.02

    logits = clip_bias_classifier_head(image_features, text_features, weight, bias)
    jax.block_until_ready(logits)

    # Pure-JAX f32 reference of the same head math.
    img_n = image_features / jnp.linalg.norm(image_features, axis=-1, keepdims=True)
    txt_n = text_features / jnp.linalg.norm(text_features, axis=-1, keepdims=True)
    ref = jnp.concatenate([img_n, txt_n], axis=-1) @ weight.T + bias

    assert logits.shape == (B, C)
    # bf16 feature/weight streaming -> compare with a bf16-appropriate tolerance.
    assert jnp.allclose(logits, ref, atol=1e-2, rtol=1e-2), (logits, ref)

    print("KERNEL_OK")
</pallas_src>

<mosaic_0001>
module attributes {stable_mosaic.version = 11 : i64} {
  func.func @_clip_head_kernel(%arg0: i32, %arg1: memref<2x32xbf16, #tpu.memory_space<vmem>>, %arg2: memref<2x32xbf16, #tpu.memory_space<vmem>>, %arg3: memref<32x128xbf16, #tpu.memory_space<vmem>>, %arg4: memref<32x128xbf16, #tpu.memory_space<vmem>>, %arg5: memref<1x128xf32, #tpu.memory_space<vmem>>, %arg6: memref<2x128xf32, #tpu.memory_space<vmem>>) attributes {dimension_semantics = [#tpu.dimension_semantics<parallel>], iteration_bounds = array<i64: 1>, scalar_prefetch = 0 : i64, scratch_operands = 0 : i64, tpu.core_type = #tpu.core_type<tc>, window_params = [{transform_indices = @transform_0, window_bounds = array<i64: 2, 32>}, {transform_indices = @transform_1, window_bounds = array<i64: 2, 32>}, {pipeline_mode = #tpu.pipeline_mode<synchronous>, transform_indices = @transform_2, window_bounds = array<i64: 32, 128>}, {pipeline_mode = #tpu.pipeline_mode<synchronous>, transform_indices = @transform_3, window_bounds = array<i64: 32, 128>}, {pipeline_mode = #tpu.pipeline_mode<synchronous>, transform_indices = @transform_4, window_bounds = array<i64: 1, 128>}, {transform_indices = @transform_5, window_bounds = array<i64: 2, 128>}]} {
    %c0 = arith.constant 0 : index
    %c0_0 = arith.constant 0 : index
    %0 = vector.load %arg1[%c0, %c0_0] : memref<2x32xbf16, #tpu.memory_space<vmem>>, vector<2x32xbf16>
    %c0_1 = arith.constant 0 : index
    %c0_2 = arith.constant 0 : index
    %1 = vector.load %arg2[%c0_1, %c0_2] : memref<2x32xbf16, #tpu.memory_space<vmem>>, vector<2x32xbf16>
    %2 = arith.extf %0 : vector<2x32xbf16> to vector<2x32xf32>
    %3 = arith.extf %1 : vector<2x32xbf16> to vector<2x32xf32>
    %4 = arith.mulf %2, %2 : vector<2x32xf32>
    %cst = arith.constant dense<0.000000e+00> : vector<2xf32>
    %5 = vector.multi_reduction <add>, %4, %cst [1] : vector<2x32xf32> to vector<2xf32>
    %6 = vector.shape_cast %5 : vector<2xf32> to vector<2x1xf32>
    %7 = math.rsqrt %6 : vector<2x1xf32>
    %8 = arith.mulf %3, %3 : vector<2x32xf32>
    %cst_3 = arith.constant dense<0.000000e+00> : vector<2xf32>
    %9 = vector.multi_reduction <add>, %8, %cst_3 [1] : vector<2x32xf32> to vector<2xf32>
    %10 = vector.shape_cast %9 : vector<2xf32> to vector<2x1xf32>
    %11 = math.rsqrt %10 : vector<2x1xf32>
    %c0_4 = arith.constant 0 : index
    %c0_5 = arith.constant 0 : index
    %12 = vector.load %arg3[%c0_4, %c0_5] : memref<32x128xbf16, #tpu.memory_space<vmem>>, vector<32x128xbf16>
    %cst_6 = arith.constant dense<0.000000e+00> : vector<2x128xf32>
    %13 = tpu.matmul %0, %12, %cst_6 {dimension_numbers = #tpu.dot_dimension_numbers<[1], [0], [0], [1], [0, 0, 1, 1], [], []>} : vector<2x32xbf16>, vector<32x128xbf16>, vector<2x128xf32> -> vector<2x128xf32>
    %c0_7 = arith.constant 0 : index
    %c0_8 = arith.constant 0 : index
    %14 = vector.load %arg4[%c0_7, %c0_8] : memref<32x128xbf16, #tpu.memory_space<vmem>>, vector<32x128xbf16>
    %cst_9 = arith.constant dense<0.000000e+00> : vector<2x128xf32>
    %15 = tpu.matmul %1, %14, %cst_9 {dimension_numbers = #tpu.dot_dimension_numbers<[1], [0], [0], [1], [0, 0, 1, 1], [], []>} : vector<2x32xbf16>, vector<32x128xbf16>, vector<2x128xf32> -> vector<2x128xf32>
    %16 = vector.broadcast %7 : vector<2x1xf32> to vector<2x128xf32>
    %17 = arith.mulf %13, %16 : vector<2x128xf32>
    %18 = vector.broadcast %11 : vector<2x1xf32> to vector<2x128xf32>
    %19 = arith.mulf %15, %18 : vector<2x128xf32>
    %20 = arith.addf %17, %19 : vector<2x128xf32>
    %c0_10 = arith.constant 0 : index
    %c0_11 = arith.constant 0 : index
    %21 = vector.load %arg5[%c0_10, %c0_11] : memref<1x128xf32, #tpu.memory_space<vmem>>, vector<1x128xf32>
    %22 = vector.broadcast %21 : vector<1x128xf32> to vector<2x128xf32>
    %23 = arith.addf %20, %22 : vector<2x128xf32>
    %c0_12 = arith.constant 0 : index
    %c0_13 = arith.constant 0 : index
    %24 = vector.load %arg6[%c0_12, %c0_13] : memref<2x128xf32, #tpu.memory_space<vmem>>, vector<2x128xf32>
    tpu.vector_store %arg6[%c0_12, %c0_13], %23 {strides = array<i32>} : memref<2x128xf32, #tpu.memory_space<vmem>>, vector<2x128xf32>,
    return
  }
  func.func @transform_0(%arg0: i32) -> (i32, i32) {
    %c0_i32 = arith.constant 0 : i32
    %c0_i32_0 = arith.constant 0 : i32
    return %arg0, %c0_i32 : i32, i32
  }
  func.func @transform_1(%arg0: i32) -> (i32, i32) {
    %c0_i32 = arith.constant 0 : i32
    %c0_i32_0 = arith.constant 0 : i32
    return %arg0, %c0_i32 : i32, i32
  }
  func.func @transform_2(%arg0: i32) -> (i32, i32) {
    %c0_i32 = arith.constant 0 : i32
    %c0_i32_0 = arith.constant 0 : i32
    %c0_i32_1 = arith.constant 0 : i32
    return %c0_i32, %c0_i32_0 : i32, i32
  }
  func.func @transform_3(%arg0: i32) -> (i32, i32) {
    %c0_i32 = arith.constant 0 : i32
    %c0_i32_0 = arith.constant 0 : i32
    %c0_i32_1 = arith.constant 0 : i32
    return %c0_i32, %c0_i32_0 : i32, i32
  }
  func.func @transform_4(%arg0: i32) -> (i32, i32) {
    %c0_i32 = arith.constant 0 : i32
    %c0_i32_0 = arith.constant 0 : i32
    %c0_i32_1 = arith.constant 0 : i32
    return %c0_i32, %c0_i32_0 : i32, i32
  }
  func.func @transform_5(%arg0: i32) -> (i32, i32) {
    %c0_i32 = arith.constant 0 : i32
    %c0_i32_0 = arith.constant 0 : i32
    return %arg0, %c0_i32 : i32, i32
  }
}

</mosaic_0001>

<llo_original>
// kernel: tpu_custom_call.1
$region0: #{tpu_custom_call.1}
  #allocation0 [shape = 'u32[]', space=smem, size = 0x4, offset = 0x4, fixed_abs, tag = 'smem constant byte address 0x4 - core index']
  #allocation1 [shape = 'u32[72,128]{1,0:T(1,128)}', space=vmem, size = 0x9000, scoped, tag = 'internal scratch']
  %s0 = inlined_call_operand.hbm [shape: bf16[2,32], index: 0, kind: input, shape index: {}]
  %s1 = inlined_call_operand.hbm [shape: bf16[2,32], index: 1, kind: input, shape index: {}]
  %s2 = inlined_call_operand.hbm [shape: bf16[32,128], index: 2, kind: input, shape index: {}]
  %s3 = inlined_call_operand.hbm [shape: bf16[32,128], index: 3, kind: input, shape index: {}]
  %s4 = inlined_call_operand.vmem [shape: f32[1,128], index: 4, kind: input, shape index: {}]
  %s5 = inlined_call_operand.hbm [shape: f32[2,128], index: 5, kind: output, shape index: {}]
  %s6 = sld [smem:[#allocation0]]
  $region46: #{tpu_custom_call.1} parent=0
    _
  %s8 = ssub.s32 1, %s6
  %s9 = scalar_select 0, %s8, %s6
  $region1: #{tpu_custom_call.1} parent=0
    #allocation2 [shape = 'u8[512]{0}', space=vmem, size = 0x400, scoped, tag = 'input window, operand 0, single buffered']
    #allocation3 [shape = 's32[1]{0}', space=sflag, size = 0x4, scoped, tag = 'scoped memory for tpu_custom_call.1']
    #allocation4 [shape = 's32[1]{0}', space=sflag, size = 0x4, scoped, tag = 'scoped memory for tpu_custom_call.1']
    #allocation5 [shape = 'u8[512]{0}', space=vmem, size = 0x400, scoped, tag = 'input window, operand 1, single buffered']
    #allocation6 [shape = 's32[1]{0}', space=sflag, size = 0x4, scoped, tag = 'scoped memory for tpu_custom_call.1']
    #allocation7 [shape = 'u8[8192]{0}', space=vmem, size = 0x2000, scoped, tag = 'input window, operand 2, single buffered']
    #allocation8 [shape = 'u8[8192]{0}', space=vmem, size = 0x2000, scoped, tag = 'input window, operand 3, single buffered']
    #allocation9 [shape = 's32[1]{0}', space=sflag, size = 0x4, scoped, tag = 'scoped memory for tpu_custom_call.1']
    #allocation10 [shape = 'u8[1024]{0}', space=vmem, size = 0x400, scoped, tag = 'output window, operand 0, single buffered']
    %10 = vsyncpa [#allocation3], 0
    %11 = vsyncpa [#allocation6], 0
    %12 = vsyncpa [#allocation9], 0
    %13 = vsyncpa [#allocation4], 0
    // Predicated region
    $region2: #{tpu_custom_call.1} parent=1 // pred_check
      _
    $region3: #{tpu_custom_call.1} parent=1 // pred_check_branch
      %15 = sbr.rel (0) target = $region5
    $region4: #{tpu_custom_call.1} parent=1 // pred_region
      %17 = vsyncadd [#allocation3], 0
      %s19 = sshll.u32 %s0, 4
      %s20 = int_to_ptr.hbm [resolvable:$true] %s19
      %s21 = sshll.u32 [#allocation2], 4
      %s22 = int_to_ptr.vmem [resolvable:$true] %s21
      %24 = dma.hbm_to_vmem [thread:$0]  %s20, 16, %s22, [#allocation3]
    $region5: #{tpu_custom_call.1} parent=1 // pred_fallthru
      _
    // Predicated region
    $region6: #{tpu_custom_call.1} parent=1 // pred_check
      _
    $region7: #{tpu_custom_call.1} parent=1 // pred_check_branch
      %26 = sbr.rel (0) target = $region9
    $region8: #{tpu_custom_call.1} parent=1 // pred_region
      %28 = vsyncadd [#allocation6], 0
      %s30 = sshll.u32 %s1, 4
      %s31 = int_to_ptr.hbm [resolvable:$true] %s30
      %s32 = sshll.u32 [#allocation5], 4
      %s33 = int_to_ptr.vmem [resolvable:$true] %s32
      %35 = dma.hbm_to_vmem [thread:$0]  %s31, 16, %s33, [#allocation6]
    $region9: #{tpu_custom_call.1} parent=1 // pred_fallthru
      _
    // Predicated region
    $region10: #{tpu_custom_call.1} parent=1 // pred_check
      _
    $region11: #{tpu_custom_call.1} parent=1 // pred_check_branch
      %37 = sbr.rel (0) target = $region13
    $region12: #{tpu_custom_call.1} parent=1 // pred_region
      %39 = vsyncadd [#allocation6], 0
      %s40 = sshll.u32 %s2, 4
      %s41 = int_to_ptr.hbm [resolvable:$true] %s40
      %s42 = sshll.u32 [#allocation7], 4
      %s43 = int_to_ptr.vmem [resolvable:$true] %s42
      %48 = dma.hbm_to_vmem [thread:$0]  %s41, 256, %s43, [#allocation6], 64, 64, 4
    $region13: #{tpu_custom_call.1} parent=1 // pred_fallthru
      _
    // Predicated region
    $region14: #{tpu_custom_call.1} parent=1 // pred_check
      _
    $region15: #{tpu_custom_call.1} parent=1 // pred_check_branch
      %50 = sbr.rel (0) target = $region17
    $region16: #{tpu_custom_call.1} parent=1 // pred_region
      %52 = vsyncadd [#allocation9], 0
      %s53 = sshll.u32 %s3, 4
      %s54 = int_to_ptr.hbm [resolvable:$true] %s53
      %s55 = sshll.u32 [#allocation8], 4
      %s56 = int_to_ptr.vmem [resolvable:$true] %s55
      %61 = dma.hbm_to_vmem [thread:$0]  %s54, 256, %s56, [#allocation9], 64, 64, 4
    $region17: #{tpu_custom_call.1} parent=1 // pred_fallthru
      _
    // Predicated region
    $region18: #{tpu_custom_call.1} parent=1 // pred_check
      _
    $region19: #{tpu_custom_call.1} parent=1 // pred_check_branch
      %63 = sbr.rel (0) target = $region21
    $region20: #{tpu_custom_call.1} parent=1 // pred_region
      _
    $region21: #{tpu_custom_call.1} parent=1 // pred_fallthru
      _
    // Predicated region
    $region22: #{tpu_custom_call.1} parent=1 // pred_check
      _
    $region23: #{tpu_custom_call.1} parent=1 // pred_check_branch
      %65 = sbr.rel (0) target = $region25
    $region24: #{tpu_custom_call.1} parent=1 // pred_region
      %67 = dma.done [#allocation3], 16
    $region25: #{tpu_custom_call.1} parent=1 // pred_fallthru
      _
    // Predicated region
    $region26: #{tpu_custom_call.1} parent=1 // pred_check
      _
    $region27: #{tpu_custom_call.1} parent=1 // pred_check_branch
      %69 = sbr.rel (0) target = $region29
    $region28: #{tpu_custom_call.1} parent=1 // pred_region
      %71 = dma.done [#allocation6], 16
    $region29: #{tpu_custom_call.1} parent=1 // pred_fallthru
      _
    // Predicated region
    $region30: #{tpu_custom_call.1} parent=1 // pred_check
      _
    $region31: #{tpu_custom_call.1} parent=1 // pred_check_branch
      %73 = sbr.rel (0) target = $region33
    $region32: #{tpu_custom_call.1} parent=1 // pred_region
      %75 = dma.done [#allocation6], 256
    $region33: #{tpu_custom_call.1} parent=1 // pred_fallthru
      _
    // Predicated region
    $region34: #{tpu_custom_call.1} parent=1 // pred_check
      _
    $region35: #{tpu_custom_call.1} parent=1 // pred_check_branch
      %77 = sbr.rel (0) target = $region37
    $region36: #{tpu_custom_call.1} parent=1 // pred_region
      %79 = dma.done [#allocation9], 256
    $region37: #{tpu_custom_call.1} parent=1 // pred_fallthru
      _
    %v81 = vld [vmem:[#allocation2] sm:$0x1]
    %v82 = vld [vmem:[#allocation5] sm:$0x1]
    %v83 = vunpack.c.l.bf16 %v81
    %v84 = vunpack.c.l.bf16 %v82
    %v85 = vmul.f32 %v83, %v83
    %vm86 = vcmask 254976
    %v87 = vsel %vm86, %v85, 0.0
    %88 = vadd.xlane.f32.xlu0 %v87
    %v89 = vpop.xlane.xlu0 %88
    %v90 = vrsqrt.pop %v89
    %v91 = vmul.f32 %v90, %v89
    %v92 = vmul.f32 %v91, %v90
    %v93 = vmul.f32 0.5, %v92
    %v94 = vsub.f32 1.5, %v93
    %v95 = vmul.f32 %v90, %v94
    %vm96 = vweird.f32 %v89
    %vm97 = vweird.f32 %v90
    %vm98 = vmor %vm96, %vm97
    %v99 = vsel %vm98, %v90, %v95
    %v100 = vmul.f32 %v84, %v84
    %v101 = vsel %vm86, %v100, 0.0
    %102 = vadd.xlane.f32.xlu0 %v101
    %v103 = vpop.xlane.xlu0 %102
    %v104 = vrsqrt.pop %v103
    %v105 = vmul.f32 %v104, %v103
    %v106 = vmul.f32 %v105, %v104
    %v107 = vmul.f32 0.5, %v106
    %v108 = vsub.f32 1.5, %v107
    %v109 = vmul.f32 %v104, %v108
    %vm110 = vweird.f32 %v103
    %vm111 = vweird.f32 %v104
    %vm112 = vmor %vm110, %vm111
    %v113 = vsel %vm112, %v104, %v109
    %v114 = vld [vmem:[#allocation7] sm:$0xf]
    %v115 = vld [vmem:[#allocation7 + $0x4] sm:$0xf]
    %v116 = vld [vmem:[#allocation7 + $0x8] sm:$0xf]
    %v117 = vld [vmem:[#allocation7 + $0xc] sm:$0xf]
    %v122 = vunpack.c.l.b16 %v114
    %v123 = vunpack.c.l.b16 %v115
    %v124 = vunpack.c.l.b16 %v116
    %v125 = vunpack.c.l.b16 %v117
    %v126 = vpack.c.b16 %v123, %v122
    %v127 = vpack.c.b16 %v125, %v124
    %vm130 = vcmask 261120
    %v132 = vsel %vm130, %v81, 0
    %134 = vmatpush.bf16.msra.mxu0 0
    %135 = vmatpush.bf16.msra.mxu0 0
    %136 = vmatpush.bf16.msra.mxu0 0
    %137 = vmatpush.bf16.msra.mxu0 0
    %138 = vmatpush.bf16.msra.mxu0 0
    %139 = vmatpush.bf16.msra.mxu0 0
    %140 = vmatpush.bf16.msra.mxu0 %v127
    %141 = vmatpush.bf16.msra.mxu0 %v126
    %142 = vmatmul.bf16.gmra.mxu0 %v132
    %v143 = vpop.f32.mrf.mxu0
    %v144 = vadd.f32 0.0, %v143
    %v145 = vpop.f32.mrf.mxu0
    %146 = vdwg.mxu0
    %v147 = vld [vmem:[#allocation8] sm:$0xf]
    %v148 = vld [vmem:[#allocation8 + $0x4] sm:$0xf]
    %v149 = vld [vmem:[#allocation8 + $0x8] sm:$0xf]
    %v150 = vld [vmem:[#allocation8 + $0xc] sm:$0xf]
    %v155 = vunpack.c.l.b16 %v147
    %v156 = vunpack.c.l.b16 %v148
    %v157 = vunpack.c.l.b16 %v149
    %v158 = vunpack.c.l.b16 %v150
    %v159 = vpack.c.b16 %v156, %v155
    %v160 = vpack.c.b16 %v158, %v157
    %v164 = vsel %vm130, %v82, 0
    %166 = vmatpush.bf16.msra.mxu0 0
    %167 = vmatpush.bf16.msra.mxu0 0
    %168 = vmatpush.bf16.msra.mxu0 0
    %169 = vmatpush.bf16.msra.mxu0 0
    %170 = vmatpush.bf16.msra.mxu0 0
    %171 = vmatpush.bf16.msra.mxu0 0
    %172 = vmatpush.bf16.msra.mxu0 %v160
    %173 = vmatpush.bf16.msra.mxu0 %v159
    %174 = vmatmul.bf16.gmra.mxu0 %v164
    %v175 = vpop.f32.mrf.mxu0
    %v176 = vadd.f32 0.0, %v175
    %v177 = vpop.f32.mrf.mxu0
    %178 = vdwg.mxu0
    %v179 = vmul.f32 %v144, %v99
    %v180 = vmul.f32 %v176, %v113
    %v181 = vadd.f32 %v179, %v180
    %v182 = vld [vmem:[%s4] sm:$0x1]
    %v184 = vperm.slane %v182, 0
    %v186 = vadd.f32 %v181, %v184
    %187 = vst [vmem:[#allocation10] sm:$0x3] %v186
    // Predicated region
    $region38: #{tpu_custom_call.1} parent=1 // pred_check
      _
    $region39: #{tpu_custom_call.1} parent=1 // pred_check_branch
      %189 = sbr.rel (0) target = $region41
    $region40: #{tpu_custom_call.1} parent=1 // pred_region
      %191 = vsyncadd [#allocation4], 0
      %s193 = sshll.u32 [#allocation10], 4
      %s194 = int_to_ptr.vmem [resolvable:$true] %s193
      %s195 = sshll.u32 %s5, 4
      %s196 = int_to_ptr.hbm [resolvable:$true] %s195
      %198 = dma.vmem_to_hbm [thread:$0]  %s194, 32, %s196, [#allocation4]
    $region41: #{tpu_custom_call.1} parent=1 // pred_fallthru
      _
    // Predicated region
    $region42: #{tpu_custom_call.1} parent=1 // pred_check
      _
    $region43: #{tpu_custom_call.1} parent=1 // pred_check_branch
      %200 = sbr.rel (0) target = $region45
    $region44: #{tpu_custom_call.1} parent=1 // pred_region
      %202 = dma.done [#allocation4], 32
    $region45: #{tpu_custom_call.1} parent=1 // pred_fallthru
      _
    %203 = vsyncpa [#allocation3], 1
    %204 = vsyncpa [#allocation6], 1
    %205 = vsyncpa [#allocation9], 1
    %206 = vsyncpa [#allocation4], 1

</llo_original>
